<compile_context>
chip_gen: v5e
topology: v5e:2x2
jax: 0.10.0
libtpu: 0.0.40
codegen_flags: <defaults>
</compile_context>

<pallas_src>
import functools
import math

import jax
import jax.numpy as jnp
from jax.experimental import pallas as pl
from jax.experimental.pallas import tpu as pltpu


SCALE = 33.3333333333  # SimCLRMarginsLossConfig.scale


def _round_up(x, m):
    return ((x + m - 1) // m) * m


def _fit_tile(target, needed, align):
    """Multiple of `align`, at most `target` (or the rounded-up problem size)."""
    t = min(int(target), _round_up(max(int(needed), 1), align))
    return max(align, (t // align) * align)


def _ntxent_lse_kernel(q_ref, k_ref, out_ref, m_ref, l_ref, *, tq, tk, n_true, n_pad):
    """One (TQ, TK) tile of the scaled similarity matrix; online logsumexp."""
    i = pl.program_id(0)
    j = pl.program_id(1)

    @pl.when(j == 0)
    def _init():
        m_ref[...] = jnp.full_like(m_ref, -1e30)
        l_ref[...] = jnp.zeros_like(l_ref)

    # Inputs are pre-normalized and pre-scaled by sqrt(scale), so the MXU
    # output is already `scale * cos_sim` (f32 accumulation).
    s = jax.lax.dot_general(
        q_ref[...], k_ref[...],
        (((1,), (1,)), ((), ())),
        preferred_element_type=jnp.float32,
    )                                                        # (TQ, TK) f32

    def _online_update(s_tile):
        m_prev = m_ref[...]
        m_new = jnp.maximum(m_prev, jnp.max(s_tile, axis=-1, keepdims=True))
        alpha = jnp.exp(m_prev - m_new)
        l_ref[...] = alpha * l_ref[...] + jnp.sum(
            jnp.exp(s_tile - m_new), axis=-1, keepdims=True)
        m_ref[...] = m_new

    # Scalar predication: mask only where needed.
    diag_hit = jnp.logical_and(j * tk < (i + 1) * tq, i * tq < (j + 1) * tk)
    if n_true != n_pad:
        pad1 = jnp.logical_and((j + 1) * tk > n_true, j * tk < n_pad)  # view-0 pad cols
        pad2 = (j + 1) * tk > n_pad + n_true                            # view-1 pad cols
        need_mask = diag_hit | pad1 | pad2
    else:
        need_mask = diag_hit

    @pl.when(need_mask)
    def _masked():
        rows_g = i * tq + jax.lax.broadcasted_iota(jnp.int32, (tq, tk), 0)
        cols_g = j * tk + jax.lax.broadcasted_iota(jnp.int32, (tq, tk), 1)
        drop = rows_g == cols_g                                # self-similarity
        if n_true != n_pad:
            drop = drop | ((cols_g >= n_true) & (cols_g < n_pad)) \
                        | (cols_g >= n_pad + n_true)           # padded columns
        _online_update(jnp.where(drop, jnp.float32(-1e30), s))

    @pl.when(jnp.logical_not(need_mask))
    def _unmasked():
        _online_update(s)

    @pl.when(j == pl.num_programs(1) - 1)
    def _finalize():
        out_ref[...] = m_ref[...] + jnp.log(l_ref[...])


def simclr_margins_loss(Z_1, Z_2, *, scale=SCALE, matmul_dtype=jnp.bfloat16,
                        block_q=None, block_k=512):
    """NT-Xent SimCLR margins loss (default config) via a tiled Pallas TPU kernel."""
    N, D = Z_1.shape
    d_pad = _round_up(D, 128)
    bytes_el = jnp.dtype(matmul_dtype).itemsize
    align_q = 16 if bytes_el < 4 else 8

    # Column (reduction) tile: lane-dense, 128-aligned.
    tk = _fit_tile(block_k, 2 * N, 128)

    # Row tile: largest multiple of 256 (<= 1024) whose working set fits a
    # ~40 MiB VMEM budget (leaves headroom on v7x's 64 MiB/TC; v5e/v6e have 128 MiB).
    if block_q is None:
        block_q = 256
        for cand in (1024, 768, 512, 256):
            est = 2 * (cand + tk) * d_pad * bytes_el + 6 * cand * tk * 4
            if est <= (40 << 20):
                block_q = cand
                break
    tq = _fit_tile(block_q, 2 * N, align_q)

    # Pad the stacked size UP to a multiple of the tiles (never shrink tiles).
    m_pad = _round_up(2 * N, math.lcm(tq, tk))
    n_pad = m_pad // 2

    # Build A (view-major stack), normalize once in f32, fold sqrt(scale),
    # compute the positive logits, then store in the matmul dtype.
    A = jnp.zeros((m_pad, d_pad), jnp.float32)
    A = A.at[:N, :D].set(Z_1.astype(jnp.float32))
    A = A.at[n_pad:n_pad + N, :D].set(Z_2.astype(jnp.float32))
    inv_norm = jax.lax.rsqrt(jnp.maximum(jnp.sum(A * A, axis=-1, keepdims=True),
                                         jnp.float32(1e-12)))
    An = A * inv_norm
    pos = jnp.float32(scale) * jnp.sum(An * jnp.roll(An, n_pad, axis=0), axis=-1)  # (m_pad,)
    A_store = (An * jnp.float32(math.sqrt(scale))).astype(matmul_dtype)

    kernel = functools.partial(_ntxent_lse_kernel, tq=tq, tk=tk,
                               n_true=N, n_pad=n_pad)

    est = 2 * (tq + tk) * d_pad * bytes_el + 6 * tq * tk * 4 + 16 * tq
    vmem_limit = int(min(56 << 20, max(32 << 20, int(est * 1.4) + (4 << 20))))

    lse = pl.pallas_call(
        kernel,
        out_shape=jax.ShapeDtypeStruct((m_pad, 1), jnp.float32),
        grid=(m_pad // tq, m_pad // tk),
        in_specs=[
            pl.BlockSpec((tq, d_pad), lambda i, j: (i, 0)),   # query rows (DMA only on i change)
            pl.BlockSpec((tk, d_pad), lambda i, j: (j, 0)),   # key columns (streamed over j)
        ],
        out_specs=pl.BlockSpec((tq, 1), lambda i, j: (i, 0)),
        scratch_shapes=[pltpu.VMEM((tq, 1), jnp.float32),     # running row max
                        pltpu.VMEM((tq, 1), jnp.float32)],    # running exp-sum
        compiler_params=pltpu.CompilerParams(
            dimension_semantics=("parallel", "arbitrary"),
            vmem_limit_bytes=vmem_limit),
    )(A_store, A_store)

    row = jnp.arange(m_pad)
    valid = (row < N) | ((row >= n_pad) & (row < n_pad + N))
    per_row = jnp.where(valid, lse[:, 0] - pos, jnp.float32(0.0))
    return jnp.sum(per_row) / jnp.float32(2 * N)


def reference_loss(Z_1, Z_2, scale=SCALE):
    """Pure-JAX reference mirroring the PyTorch forward (NT-Xent default)."""
    A = jnp.concatenate([Z_1, Z_2], axis=0).astype(jnp.float32)
    M = A.shape[0]
    N = M // 2
    An = A / jnp.linalg.norm(A, axis=-1, keepdims=True)
    S = scale * jnp.matmul(An, An.T, precision=jax.lax.Precision.HIGHEST)
    idx = jnp.arange(M)
    masked = jnp.where(idx[:, None] == idx[None, :], -jnp.inf, S)
    lse = jax.scipy.special.logsumexp(masked, axis=-1)
    pos = S[idx, (idx + N) % M]
    return jnp.mean(lse - pos)


if __name__ == "__main__":
    key = jax.random.PRNGKey(0)
    ks = jax.random.split(key, 6)

    # Case 1: small shapes, default (auto) tiling; f32 and bf16 matmul paths.
    Z1 = jax.random.normal(ks[0], (8, 32), dtype=jnp.float32)
    Z2 = jax.random.normal(ks[1], (8, 32), dtype=jnp.float32)
    ref = float(jax.block_until_ready(reference_loss(Z1, Z2)))
    got_f32 = float(jax.block_until_ready(
        simclr_margins_loss(Z1, Z2, matmul_dtype=jnp.float32)))
    got_bf16 = float(jax.block_until_ready(simclr_margins_loss(Z1, Z2)))
    assert math.isfinite(got_f32) and math.isfinite(got_bf16)
    assert abs(got_f32 - ref) < 2e-3 * max(1.0, abs(ref)), (got_f32, ref)
    assert abs(got_bf16 - ref) < 5e-2 * max(1.0, abs(ref)), (got_bf16, ref)

    # Case 2: ragged N (padded rows/columns) with small explicit tiles.
    Z1b = jax.random.normal(ks[2], (20, 48), dtype=jnp.float32)
    Z2b = jax.random.normal(ks[3], (20, 48), dtype=jnp.float32)
    ref_b = float(jax.block_until_ready(reference_loss(Z1b, Z2b)))
    got_b = float(jax.block_until_ready(
        simclr_margins_loss(Z1b, Z2b, matmul_dtype=jnp.float32,
                            block_q=32, block_k=128)))
    assert abs(got_b - ref_b) < 2e-3 * max(1.0, abs(ref_b)), (got_b, ref_b)

    # Case 3: multi-tile grid, no padding -> exercises both the masked
    # (diagonal) and the unmasked fast path of the predicated kernel.
    Z1c = jax.random.normal(ks[4], (128, 64), dtype=jnp.float32)
    Z2c = jax.random.normal(ks[5], (128, 64), dtype=jnp.float32)
    ref_c = float(jax.block_until_ready(reference_loss(Z1c, Z2c)))
    got_c = float(jax.block_until_ready(
        simclr_margins_loss(Z1c, Z2c, matmul_dtype=jnp.float32,
                            block_q=32, block_k=128)))
    assert abs(got_c - ref_c) < 2e-3 * max(1.0, abs(ref_c)), (got_c, ref_c)

    print("KERNEL_OK")
</pallas_src>

<mosaic_0001>
module attributes {stable_mosaic.version = 11 : i64} {
  func.func @_ntxent_lse_kernel(%arg0: i32, %arg1: i32, %arg2: memref<16x128xf32, #tpu.memory_space<vmem>>, %arg3: memref<128x128xf32, #tpu.memory_space<vmem>>, %arg4: memref<16x1xf32, #tpu.memory_space<vmem>>, %arg5: memref<16x1xf32, #tpu.memory_space<vmem>>, %arg6: memref<16x1xf32, #tpu.memory_space<vmem>>) attributes {dimension_semantics = [#tpu.dimension_semantics<parallel>, #tpu.dimension_semantics<arbitrary>], iteration_bounds = array<i64: 8, 1>, scalar_prefetch = 0 : i64, scratch_operands = 2 : i64, tpu.core_type = #tpu.core_type<tc>, window_params = [{transform_indices = @transform_0, window_bounds = array<i64: 16, 128>}, {transform_indices = @transform_1, window_bounds = array<i64: 128, 128>}, {transform_indices = @transform_2, window_bounds = array<i64: 16, 1>}]} {
    %c0_i32 = arith.constant 0 : i32
    %0 = arith.cmpi eq, %arg1, %c0_i32 : i32
    %1 = arith.extui %0 : i1 to i32
    %c0_i32_0 = arith.constant 0 : i32
    %2 = arith.cmpi ne, %1, %c0_i32_0 : i32
    scf.if %2 {
      %cst_16 = arith.constant -1.000000e+30 : f32
      %34 = vector.broadcast %cst_16 : f32 to vector<16x1xf32>
      %c0_17 = arith.constant 0 : index
      %c0_18 = arith.constant 0 : index
      %35 = vector.load %arg5[%c0_17, %c0_18] : memref<16x1xf32, #tpu.memory_space<vmem>>, vector<16x1xf32>
      tpu.vector_store %arg5[%c0_17, %c0_18], %34 {strides = array<i32>} : memref<16x1xf32, #tpu.memory_space<vmem>>, vector<16x1xf32>,
      %cst_19 = arith.constant 0.000000e+00 : f32
      %36 = vector.broadcast %cst_19 : f32 to vector<16x1xf32>
      %c0_20 = arith.constant 0 : index
      %c0_21 = arith.constant 0 : index
      %37 = vector.load %arg6[%c0_20, %c0_21] : memref<16x1xf32, #tpu.memory_space<vmem>>, vector<16x1xf32>
      tpu.vector_store %arg6[%c0_20, %c0_21], %36 {strides = array<i32>} : memref<16x1xf32, #tpu.memory_space<vmem>>, vector<16x1xf32>,
    } else {
    }
    %c0 = arith.constant 0 : index
    %c0_1 = arith.constant 0 : index
    %3 = vector.load %arg2[%c0, %c0_1] : memref<16x128xf32, #tpu.memory_space<vmem>>, vector<16x128xf32>
    %c0_2 = arith.constant 0 : index
    %c0_3 = arith.constant 0 : index
    %4 = vector.load %arg3[%c0_2, %c0_3] : memref<128x128xf32, #tpu.memory_space<vmem>>, vector<128x128xf32>
    %cst = arith.constant dense<0.000000e+00> : vector<16x128xf32>
    %5 = tpu.matmul %3, %4, %cst {dimension_numbers = #tpu.dot_dimension_numbers<[1], [1], [0], [0], [0, 0, 1, 0], [], []>} : vector<16x128xf32>, vector<128x128xf32>, vector<16x128xf32> -> vector<16x128xf32>
    %c128_i32 = arith.constant 128 : i32
    %6 = arith.muli %arg1, %c128_i32 : i32
    %c1_i32 = arith.constant 1 : i32
    %7 = arith.addi %arg0, %c1_i32 : i32
    %c16_i32 = arith.constant 16 : i32
    %8 = arith.muli %7, %c16_i32 : i32
    %9 = arith.cmpi slt, %6, %8 : i32
    %c16_i32_4 = arith.constant 16 : i32
    %10 = arith.muli %arg0, %c16_i32_4 : i32
    %c1_i32_5 = arith.constant 1 : i32
    %11 = arith.addi %arg1, %c1_i32_5 : i32
    %c128_i32_6 = arith.constant 128 : i32
    %12 = arith.muli %11, %c128_i32_6 : i32
    %13 = arith.cmpi slt, %10, %12 : i32
    %14 = arith.andi %9, %13 : i1
    %c1_i32_7 = arith.constant 1 : i32
    %15 = arith.addi %arg1, %c1_i32_7 : i32
    %c128_i32_8 = arith.constant 128 : i32
    %16 = arith.muli %15, %c128_i32_8 : i32
    %c8_i32 = arith.constant 8 : i32
    %17 = arith.cmpi sgt, %16, %c8_i32 : i32
    %c128_i32_9 = arith.constant 128 : i32
    %18 = arith.muli %arg1, %c128_i32_9 : i32
    %c64_i32 = arith.constant 64 : i32
    %19 = arith.cmpi slt, %18, %c64_i32 : i32
    %20 = arith.andi %17, %19 : i1
    %c1_i32_10 = arith.constant 1 : i32
    %21 = arith.addi %arg1, %c1_i32_10 : i32
    %c128_i32_11 = arith.constant 128 : i32
    %22 = arith.muli %21, %c128_i32_11 : i32
    %c72_i32 = arith.constant 72 : i32
    %23 = arith.cmpi sgt, %22, %c72_i32 : i32
    %24 = arith.ori %14, %20 : i1
    %25 = arith.ori %24, %23 : i1
    %26 = arith.extui %25 : i1 to i32
    %c0_i32_12 = arith.constant 0 : i32
    %27 = arith.cmpi ne, %26, %c0_i32_12 : i32
    scf.if %27 {
      %c16_i32_16 = arith.constant 16 : i32
      %34 = arith.muli %arg0, %c16_i32_16 : i32
      %35 = tpu.iota {dimensions = array<i32: 0>} : vector<16x128xi32>
      %36 = vector.broadcast %34 : i32 to vector<16x128xi32>
      %37 = arith.addi %36, %35 : vector<16x128xi32>
      %c128_i32_17 = arith.constant 128 : i32
      %38 = arith.muli %arg1, %c128_i32_17 : i32
      %39 = tpu.iota {dimensions = array<i32: 1>} : vector<16x128xi32>
      %40 = vector.broadcast %38 : i32 to vector<16x128xi32>
      %41 = arith.addi %40, %39 : vector<16x128xi32>
      %42 = arith.cmpi eq, %37, %41 : vector<16x128xi32>
      %c8_i32_18 = arith.constant 8 : i32
      %43 = vector.broadcast %c8_i32_18 : i32 to vector<16x128xi32>
      %44 = arith.cmpi sge, %41, %43 : vector<16x128xi32>
      %c64_i32_19 = arith.constant 64 : i32
      %45 = vector.broadcast %c64_i32_19 : i32 to vector<16x128xi32>
      %46 = arith.cmpi slt, %41, %45 : vector<16x128xi32>
      %47 = arith.andi %44, %46 : vector<16x128xi1>
      %48 = arith.ori %42, %47 : vector<16x128xi1>
      %c72_i32_20 = arith.constant 72 : i32
      %49 = vector.broadcast %c72_i32_20 : i32 to vector<16x128xi32>
      %50 = arith.cmpi sge, %41, %49 : vector<16x128xi32>
      %51 = arith.ori %48, %50 : vector<16x128xi1>
      %cst_21 = arith.constant -1.000000e+30 : f32
      %52 = vector.broadcast %cst_21 : f32 to vector<16x128xf32>
      %53 = arith.select %51, %52, %5 : vector<16x128xi1>, vector<16x128xf32>
      %c0_22 = arith.constant 0 : index
      %c0_23 = arith.constant 0 : index
      %54 = vector.load %arg5[%c0_22, %c0_23] : memref<16x1xf32, #tpu.memory_space<vmem>>, vector<16x1xf32>
      %cst_24 = arith.constant dense<0xFF800000> : vector<16xf32>
      %55 = vector.multi_reduction <maximumf>, %53, %cst_24 [1] : vector<16x128xf32> to vector<16xf32>
      %56 = vector.shape_cast %55 : vector<16xf32> to vector<16x1xf32>
      %57 = arith.maximumf %54, %56 : vector<16x1xf32>
      %58 = arith.subf %54, %57 : vector<16x1xf32>
      %59 = math.exp %58 : vector<16x1xf32>
      %c0_25 = arith.constant 0 : index
      %c0_26 = arith.constant 0 : index
      %60 = vector.load %arg6[%c0_25, %c0_26] : memref<16x1xf32, #tpu.memory_space<vmem>>, vector<16x1xf32>
      %61 = arith.mulf %59, %60 : vector<16x1xf32>
      %62 = vector.broadcast %57 : vector<16x1xf32> to vector<16x128xf32>
      %63 = arith.subf %53, %62 : vector<16x128xf32>
      %64 = math.exp %63 : vector<16x128xf32>
      %cst_27 = arith.constant dense<0.000000e+00> : vector<16xf32>
      %65 = vector.multi_reduction <add>, %64, %cst_27 [1] : vector<16x128xf32> to vector<16xf32>
      %66 = vector.shape_cast %65 : vector<16xf32> to vector<16x1xf32>
      %67 = arith.addf %61, %66 : vector<16x1xf32>
      %c0_28 = arith.constant 0 : index
      %c0_29 = arith.constant 0 : index
      %68 = vector.load %arg6[%c0_28, %c0_29] : memref<16x1xf32, #tpu.memory_space<vmem>>, vector<16x1xf32>
      tpu.vector_store %arg6[%c0_28, %c0_29], %67 {strides = array<i32>} : memref<16x1xf32, #tpu.memory_space<vmem>>, vector<16x1xf32>,
      %c0_30 = arith.constant 0 : index
      %c0_31 = arith.constant 0 : index
      %69 = vector.load %arg5[%c0_30, %c0_31] : memref<16x1xf32, #tpu.memory_space<vmem>>, vector<16x1xf32>
      tpu.vector_store %arg5[%c0_30, %c0_31], %57 {strides = array<i32>} : memref<16x1xf32, #tpu.memory_space<vmem>>, vector<16x1xf32>,
    } else {
    }
    %true = arith.constant true
    %28 = arith.xori %25, %true : i1
    %29 = arith.extui %28 : i1 to i32
    %c0_i32_13 = arith.constant 0 : i32
    %30 = arith.cmpi ne, %29, %c0_i32_13 : i32
    scf.if %30 {
      %c0_16 = arith.constant 0 : index
      %c0_17 = arith.constant 0 : index
      %34 = vector.load %arg5[%c0_16, %c0_17] : memref<16x1xf32, #tpu.memory_space<vmem>>, vector<16x1xf32>
      %cst_18 = arith.constant dense<0xFF800000> : vector<16xf32>
      %35 = vector.multi_reduction <maximumf>, %5, %cst_18 [1] : vector<16x128xf32> to vector<16xf32>
      %36 = vector.shape_cast %35 : vector<16xf32> to vector<16x1xf32>
      %37 = arith.maximumf %34, %36 : vector<16x1xf32>
      %38 = arith.subf %34, %37 : vector<16x1xf32>
      %39 = math.exp %38 : vector<16x1xf32>
      %c0_19 = arith.constant 0 : index
      %c0_20 = arith.constant 0 : index
      %40 = vector.load %arg6[%c0_19, %c0_20] : memref<16x1xf32, #tpu.memory_space<vmem>>, vector<16x1xf32>
      %41 = arith.mulf %39, %40 : vector<16x1xf32>
      %42 = vector.broadcast %37 : vector<16x1xf32> to vector<16x128xf32>
      %43 = arith.subf %5, %42 : vector<16x128xf32>
      %44 = math.exp %43 : vector<16x128xf32>
      %cst_21 = arith.constant dense<0.000000e+00> : vector<16xf32>
      %45 = vector.multi_reduction <add>, %44, %cst_21 [1] : vector<16x128xf32> to vector<16xf32>
      %46 = vector.shape_cast %45 : vector<16xf32> to vector<16x1xf32>
      %47 = arith.addf %41, %46 : vector<16x1xf32>
      %c0_22 = arith.constant 0 : index
      %c0_23 = arith.constant 0 : index
      %48 = vector.load %arg6[%c0_22, %c0_23] : memref<16x1xf32, #tpu.memory_space<vmem>>, vector<16x1xf32>
      tpu.vector_store %arg6[%c0_22, %c0_23], %47 {strides = array<i32>} : memref<16x1xf32, #tpu.memory_space<vmem>>, vector<16x1xf32>,
      %c0_24 = arith.constant 0 : index
      %c0_25 = arith.constant 0 : index
      %49 = vector.load %arg5[%c0_24, %c0_25] : memref<16x1xf32, #tpu.memory_space<vmem>>, vector<16x1xf32>
      tpu.vector_store %arg5[%c0_24, %c0_25], %37 {strides = array<i32>} : memref<16x1xf32, #tpu.memory_space<vmem>>, vector<16x1xf32>,
    } else {
    }
    %c0_i32_14 = arith.constant 0 : i32
    %31 = arith.cmpi eq, %arg1, %c0_i32_14 : i32
    %32 = arith.extui %31 : i1 to i32
    %c0_i32_15 = arith.constant 0 : i32
    %33 = arith.cmpi ne, %32, %c0_i32_15 : i32
    scf.if %33 {
      %c0_16 = arith.constant 0 : index
      %c0_17 = arith.constant 0 : index
      %34 = vector.load %arg5[%c0_16, %c0_17] : memref<16x1xf32, #tpu.memory_space<vmem>>, vector<16x1xf32>
      %c0_18 = arith.constant 0 : index
      %c0_19 = arith.constant 0 : index
      %35 = vector.load %arg6[%c0_18, %c0_19] : memref<16x1xf32, #tpu.memory_space<vmem>>, vector<16x1xf32>
      %36 = math.log %35 : vector<16x1xf32>
      %37 = arith.addf %34, %36 : vector<16x1xf32>
      %c0_20 = arith.constant 0 : index
      %c0_21 = arith.constant 0 : index
      %38 = vector.load %arg4[%c0_20, %c0_21] : memref<16x1xf32, #tpu.memory_space<vmem>>, vector<16x1xf32>
      tpu.vector_store %arg4[%c0_20, %c0_21], %37 {strides = array<i32>} : memref<16x1xf32, #tpu.memory_space<vmem>>, vector<16x1xf32>,
    } else {
    }
    return
  }
  func.func @transform_0(%arg0: i32, %arg1: i32) -> (i32, i32) {
    %c0_i32 = arith.constant 0 : i32
    %c0_i32_0 = arith.constant 0 : i32
    return %arg0, %c0_i32 : i32, i32
  }
  func.func @transform_1(%arg0: i32, %arg1: i32) -> (i32, i32) {
    %c0_i32 = arith.constant 0 : i32
    %c0_i32_0 = arith.constant 0 : i32
    return %arg1, %c0_i32 : i32, i32
  }
  func.func @transform_2(%arg0: i32, %arg1: i32) -> (i32, i32) {
    %c0_i32 = arith.constant 0 : i32
    %c0_i32_0 = arith.constant 0 : i32
    return %arg0, %c0_i32 : i32, i32
  }
}

</mosaic_0001>

<llo_original>
// kernel: tpu_custom_call.1
$region0: #{tpu_custom_call.1}
  #allocation0 [shape = 'u32[]', space=smem, size = 0x4, offset = 0x4, fixed_abs, tag = 'smem constant byte address 0x4 - core index']
  #allocation1 [shape = 'u32[72,128]{1,0:T(1,128)}', space=vmem, size = 0x9000, scoped, tag = 'internal scratch']
  #allocation2 [shape = 'f32[16,1]{1,0:T(8,128)}', space=vmem, size = 0x2000, scoped, tag = 'scratch operand']
  #allocation3 [shape = 'f32[16,1]{1,0:T(8,128)}', space=vmem, size = 0x2000, scoped, tag = 'scratch operand']
  %s0 = inlined_call_operand.hbm [shape: f32[128,128], index: 0, kind: input, shape index: {}]
  %s1 = inlined_call_operand.hbm [shape: f32[128,128], index: 1, kind: input, shape index: {}]
  %s2 = inlined_call_operand.vmem [shape: f32[128,1], index: 2, kind: output, shape index: {}]
  %s3 = sld [smem:[#allocation0]]
  $region65: #{tpu_custom_call.1} parent=0
    _
  %s5 = ssub.s32 1, %s3
  %s6 = scalar_select 0, %s5, %s3
  $region1: #{tpu_custom_call.1} parent=0
    #allocation4 [shape = 'u8[16384]{0}', space=vmem, size = 0x4000, scoped, tag = 'input window, operand 0']
    #allocation5 [shape = 's32[2]{0}', space=sflag, size = 0x8, scoped, tag = 'scoped memory for tpu_custom_call.1']
    #allocation6 [shape = 'u8[65536]{0}', space=vmem, size = 0x10000, scoped, tag = 'input window, operand 1, single buffered']
    #allocation7 [shape = 's32[1]{0}', space=sflag, size = 0x4, scoped, tag = 'scoped memory for tpu_custom_call.1']
    %7 = vsyncpa [#allocation5], 0
    %s8 = scalar_lea.sflag [#allocation5], 1
    %9 = vsyncpa %s8, 0
    %10 = vsyncpa [#allocation7], 0
    loop: start=0, step=1, limit=10
    $region2: #{tpu_custom_call.1} parent=1 // loop_pre_header
      _
    $region3: #{tpu_custom_call.1} parent=1 // loop_header
      %s12 = sphi 0, %s16
      %p13 = scmp.ge.s32.totalorder %s12, 10
      %s19 = sphi 0, %s31
      %s20 = sphi 0, %s27
      %s21 = sphi 0, %s19
      %s22 = sphi 0, %s20
      %s23 = sphi 0, %s21
      %s24 = sphi 0, %s22
      %s34 = sphi 0, %s36
      %s37 = sphi 0, %s34
      %s38 = sphi 0, %s37
      %s54 = sphi 0, %s38
      %s60 = sphi 0, %s62
      %s63 = sphi 0, %s60
      %s64 = sphi 0, %s63
      %s80 = sphi 0, %s64
      %s86 = sphi 0, %s88
      %s89 = sphi 0, %s86
      %s90 = sphi 0, %s89
      %s106 = sphi 0, %s90
    $region4: #{tpu_custom_call.1} parent=1 // loop_header_branch
      %15 = sbr.rel (%p13) target = $region8
    $region5: #{tpu_custom_call.1} parent=1 // loop_body
      %s17 = ssub.s32 %s12, 1
      %s18 = ssub.s32 %s12, 2
      %s25 = sadd.s32 1, %s20
      %p26 = scmp.ge.s32.totalorder %s25, 1
      %s27 = scalar_select %p26, 0, %s25
      %s28 = sadd.s32 1, %s19
      %s29 = scalar_select %p26, %s28, %s19
      %p30 = scmp.ge.s32.totalorder %s29, 8
      %s31 = scalar_select %p30, 0, %s29
      %s32 = ssub.s32 %s19, %s31
      %p33 = scmp.eq.s32.totalorder %s32, 0
      %s35 = sadd.s32 %s34, 1
      %s36 = scalar_select %p33, %s34, %s35
      %p39 = pneg %p33
      %p40 = scmp.eq.s32.totalorder %s12, 7
      %p41 = por %p39, %p40
      %p42 = scmp.ne.s32.totalorder %s34, %s37
      %p43 = scmp.eq.s32.totalorder %s12, 0
      %p44 = por %p42, %p43
      %p45 = scmp.ne.s32.totalorder %s34, %s37
      %p46 = scmp.eq.s32.totalorder %s17, 7
      %p47 = por %p45, %p46
      %p48 = scmp.ne.s32.totalorder %s37, %s38
      %p49 = scmp.eq.s32.totalorder %s17, 0
      %p50 = por %p48, %p49
      %p51 = scmp.ne.s32.totalorder %s37, %s38
      %p52 = scmp.eq.s32.totalorder %s18, 7
      %p53 = por %p51, %p52
      %p55 = scmp.ne.s32.totalorder %s38, %s54
      %p56 = scmp.eq.s32.totalorder %s18, 0
      %p57 = por %p55, %p56
      %s58 = ssub.s32 %s20, %s27
      %p59 = scmp.eq.s32.totalorder %s58, 0
      %s61 = sadd.s32 %s60, 1
      %s62 = scalar_select %p59, %s60, %s61
      %p65 = pneg %p59
      %p66 = scmp.eq.s32.totalorder %s12, 7
      %p67 = por %p65, %p66
      %p68 = scmp.ne.s32.totalorder %s60, %s63
      %p69 = scmp.eq.s32.totalorder %s12, 0
      %p70 = por %p68, %p69
      %p71 = scmp.ne.s32.totalorder %s60, %s63
      %p72 = scmp.eq.s32.totalorder %s17, 7
      %p73 = por %p71, %p72
      %p74 = scmp.ne.s32.totalorder %s63, %s64
      %p75 = scmp.eq.s32.totalorder %s17, 0
      %p76 = por %p74, %p75
      %p77 = scmp.ne.s32.totalorder %s63, %s64
      %p78 = scmp.eq.s32.totalorder %s18, 7
      %p79 = por %p77, %p78
      %p81 = scmp.ne.s32.totalorder %s64, %s80
      %p82 = scmp.eq.s32.totalorder %s18, 0
      %p83 = por %p81, %p82
      %s84 = ssub.s32 %s19, %s31
      %p85 = scmp.eq.s32.totalorder %s84, 0
      %s87 = sadd.s32 %s86, 1
      %s88 = scalar_select %p85, %s86, %s87
      %p91 = pneg %p85
      %p92 = scmp.eq.s32.totalorder %s12, 7
      %p93 = por %p91, %p92
      %p94 = scmp.ne.s32.totalorder %s86, %s89
      %p95 = scmp.eq.s32.totalorder %s12, 0
      %p96 = por %p94, %p95
      %p97 = scmp.ne.s32.totalorder %s86, %s89
      %p98 = scmp.eq.s32.totalorder %s17, 7
      %p99 = por %p97, %p98
      %p100 = scmp.ne.s32.totalorder %s89, %s90
      %p101 = scmp.eq.s32.totalorder %s17, 0
      %p102 = por %p100, %p101
      %p103 = scmp.ne.s32.totalorder %s89, %s90
      %p104 = scmp.eq.s32.totalorder %s18, 7
      %p105 = por %p103, %p104
      %p107 = scmp.ne.s32.totalorder %s90, %s106
      %p108 = scmp.eq.s32.totalorder %s18, 0
      %p109 = por %p107, %p108
      %p110 = scmp.le.s32.totalorder 1, %s12
      %p111 = scmp.lt.s32.totalorder %s12, 9
      %p112 = pnand %p110, %p111
      %p113 = pneg %p112
      // Predicated region
      $region9: #{tpu_custom_call.1} parent=5 // pred_check
        _
      $region10: #{tpu_custom_call.1} parent=5 // pred_check_branch
        %115 = sbr.rel (%p112) target = $region12
      $region11: #{tpu_custom_call.1} parent=5 // pred_region
        %s116 = ssub.s32 %s12, 1
        // Predicated region
        $region13: #{tpu_custom_call.1} parent=11 // pred_check
          %p117 = pneg %p76
        $region14: #{tpu_custom_call.1} parent=11 // pred_check_branch
          %119 = sbr.rel (%p117) target = $region16
        $region15: #{tpu_custom_call.1} parent=11 // pred_region
          %s120 = smul.u32 16, %s22
          %122 = vsyncadd [#allocation7], 0
          %s123 = smul.addr %s120, 8
          %s124 = scalar_lea.hbm %s1, %s123
          %s125 = sshll.u32 %s124, 4
          %s126 = int_to_ptr.hbm [resolvable:$true] %s125
          %s127 = sshll.u32 [#allocation6], 4
          %s128 = int_to_ptr.vmem [resolvable:$true] %s127
          %133 = dma.hbm_to_vmem [thread:$0]  %s126, 2048, %s128, [#allocation7], 128, 128, 8
        $region16: #{tpu_custom_call.1} parent=11 // pred_fallthru
          _
      $region12: #{tpu_custom_call.1} parent=5 // pred_fallthru
        _
      %p134 = scmp.lt.s32.totalorder %s12, 8
      // Predicated region
      $region17: #{tpu_custom_call.1} parent=5 // pred_check
        %p135 = pneg %p134
      $region18: #{tpu_custom_call.1} parent=5 // pred_check_branch
        %137 = sbr.rel (%p135) target = $region20
      $region19: #{tpu_custom_call.1} parent=5 // pred_region
        // Predicated region
        $region21: #{tpu_custom_call.1} parent=19 // pred_check
          %p138 = pneg %p44
        $region22: #{tpu_custom_call.1} parent=19 // pred_check_branch
          %140 = sbr.rel (%p138) target = $region24
        $region23: #{tpu_custom_call.1} parent=19 // pred_region
          %s141 = sand.u32 %s34, 1
          %s142 = scalar_lea.sflag [#allocation5], %s141
          %s143 = sand.u32 %s34, 1
          %s144 = smul.addr %s143, 16
          %s145 = scalar_lea.vmem [#allocation4], %s144
          %s146 = smul.u32 2, %s19
          %148 = vsyncadd %s142, 0
          %s149 = smul.addr %s146, 8
          %s150 = scalar_lea.hbm %s0, %s149
          %s151 = sshll.u32 %s150, 4
          %s152 = int_to_ptr.hbm [resolvable:$true] %s151
          %s153 = sshll.u32 %s145, 4
          %s154 = int_to_ptr.vmem [resolvable:$true] %s153
          %159 = dma.hbm_to_vmem [thread:$0]  %s152, 256, %s154, %s142, 128, 128, 8
        $region24: #{tpu_custom_call.1} parent=19 // pred_fallthru
          _
      $region20: #{tpu_custom_call.1} parent=5 // pred_fallthru
        _
      %p160 = scmp.le.s32.totalorder 1, %s12
      %p161 = scmp.lt.s32.totalorder %s12, 9
      %p162 = pnand %p160, %p161
      %p163 = pneg %p162
      // Predicated region
      $region25: #{tpu_custom_call.1} parent=5 // pred_check
        _
      $region26: #{tpu_custom_call.1} parent=5 // pred_check_branch
        %165 = sbr.rel (%p162) target = $region28
      $region27: #{tpu_custom_call.1} parent=5 // pred_region
        %s166 = ssub.s32 %s12, 1
        %s167 = sand.u32 %s37, 1
        %s168 = scalar_lea.sflag [#allocation5], %s167
        %s169 = sand.u32 %s37, 1
        %s170 = smul.addr %s169, 16
        %s171 = scalar_lea.vmem [#allocation4], %s170
        // Predicated region
        $region29: #{tpu_custom_call.1} parent=27 // pred_check
          %p172 = pneg %p50
        $region30: #{tpu_custom_call.1} parent=27 // pred_check_branch
          %174 = sbr.rel (%p172) target = $region32
        $region31: #{tpu_custom_call.1} parent=27 // pred_region
          %176 = dma.done %s168, 256
        $region32: #{tpu_custom_call.1} parent=27 // pred_fallthru
          _
        // Predicated region
        $region33: #{tpu_custom_call.1} parent=27 // pred_check
          %p177 = pneg %p76
        $region34: #{tpu_custom_call.1} parent=27 // pred_check_branch
          %179 = sbr.rel (%p177) target = $region36
        $region35: #{tpu_custom_call.1} parent=27 // pred_region
          %181 = dma.done [#allocation7], 2048
        $region36: #{tpu_custom_call.1} parent=27 // pred_fallthru
          _
        %s182 = sand.u32 %s37, 1
        %s183 = scalar_lea.sflag [#allocation5], %s182
        %s184 = sand.u32 %s37, 1
        %s185 = smul.addr %s184, 16
        %s186 = scalar_lea.vmem [#allocation4], %s185
        %p187 = pneg %p50
        %p188 = pneg %p47
        %p189 = pneg %p76
        %p190 = pneg %p73
        %p191 = pneg %p102
        %p192 = pneg %p99
        %s193 = smul.u32 2, %s21
        %p194 = scmp.lt.s32.totalorder %s193, 15
        %s195 = scalar_select %p194, %s193, 15
        %s196 = smul.addr %s195, 8
        %s197 = scalar_lea.vmem %s2, %s196
        %s198 = smul.u32 2, %s21
        %s199 = smul.u32 16, %s22
        %s200 = smul.u32 2, %s21
        %p201 = scmp.lt.s32.totalorder %s200, 15
        %s202 = scalar_select %p201, %s200, 15
        %s203 = smul.addr %s202, 8
        %s204 = scalar_lea.vmem %s2, %s203
        %s205 = smul.u32 2, %s21
        %p206 = scmp.eq.s32.totalorder %s22, 0
        // Predicated region
        $region37: #{tpu_custom_call.1} parent=27 // pred_check
          %p207 = pneg %p206
        $region38: #{tpu_custom_call.1} parent=27 // pred_check_branch
          %209 = sbr.rel (%p207) target = $region40
        $region39: #{tpu_custom_call.1} parent=27 // pred_region
          %vm210 = vcmask 7168
          %211 = vst.msk [vmem:[#allocation2] sm:$0xff] %vm210, -1e+30
          %212 = vst.msk [vmem:[#allocation2 + $0x8] sm:$0xff] %vm210, -1e+30
          %213 = vst.msk [vmem:[#allocation3] sm:$0xff] %vm210, 0.0
          %214 = vst.msk [vmem:[#allocation3 + $0x8] sm:$0xff] %vm210, 0.0
        $region40: #{tpu_custom_call.1} parent=27 // pred_fallthru
          _
        %v215 = vld [vmem:[%s171] sm:$0xff]
        %v216 = vld [vmem:[%s171 + $0x8] sm:$0xff]
        %v217 = vld [vmem:[#allocation6] sm:$0xff]
        %v218 = vld [vmem:[#allocation6 + $0x8] sm:$0xff]
        %v219 = vld [vmem:[#allocation6 + $0x10] sm:$0xff]
        %v220 = vld [vmem:[#allocation6 + $0x18] sm:$0xff]
        %v221 = vld [vmem:[#allocation6 + $0x20] sm:$0xff]
        %v222 = vld [vmem:[#allocation6 + $0x28] sm:$0xff]
        %v223 = vld [vmem:[#allocation6 + $0x30] sm:$0xff]
        %v224 = vld [vmem:[#allocation6 + $0x38] sm:$0xff]
        %v225 = vld [vmem:[#allocation6 + $0x40] sm:$0xff]
        %v226 = vld [vmem:[#allocation6 + $0x48] sm:$0xff]
        %v227 = vld [vmem:[#allocation6 + $0x50] sm:$0xff]
        %v228 = vld [vmem:[#allocation6 + $0x58] sm:$0xff]
        %v229 = vld [vmem:[#allocation6 + $0x60] sm:$0xff]
        %v230 = vld [vmem:[#allocation6 + $0x68] sm:$0xff]
        %v231 = vld [vmem:[#allocation6 + $0x70] sm:$0xff]
        %v232 = vld [vmem:[#allocation6 + $0x78] sm:$0xff]
        %233 = vmatpush.xpose.msra.mxu0 %v232
        %234 = vmatpush.xpose.msra.mxu0 %v231
        %235 = vmatpush.xpose.msra.mxu0 %v230
        %236 = vmatpush.xpose.msra.mxu0 %v229
        %237 = vmatpush.xpose.msra.mxu0 %v228
        %238 = vmatpush.xpose.msra.mxu0 %v227
        %239 = vmatpush.xpose.msra.mxu0 %v226
        %240 = vmatpush.xpose.msra.mxu0 %v225
        %241 = vmatpush.xpose.msra.mxu0 %v224
        %242 = vmatpush.xpose.msra.mxu0 %v223
        %243 = vmatpush.xpose.msra.mxu0 %v222
        %244 = vmatpush.xpose.msra.mxu0 %v221
        %245 = vmatpush.xpose.msra.mxu0 %v220
        %246 = vmatpush.xpose.msra.mxu0 %v219
        %247 = vmatpush.xpose.msra.mxu0 %v218
        %248 = vmatpush.xpose.msra.mxu0 %v217
        %249 = vmatmul.f32.gmra.mxu0 %v215
        %v250 = vpop.f32.mrf.mxu0
        %v251 = vadd.f32 0.0, %v250
        %252 = vmatmul.f32.gmra.mxu0 %v216
        %v253 = vpop.f32.mrf.mxu0
        %v254 = vadd.f32 0.0, %v253
        %255 = vdwg.mxu0
        %s256 = smul.u32 %s22, 128
        %s257 = sadd.s32 %s21, 1
        %s258 = smul.u32 %s257, 16
        %p259 = scmp.lt.s32.totalorder %s256, %s258
        %s260 = smul.u32 %s21, 16
        %s261 = sadd.s32 %s22, 1
        %s262 = smul.u32 %s261, 128
        %p263 = scmp.lt.s32.totalorder %s260, %s262
        %p264 = pnand %p259, %p263
        %p265 = pneg %p264
        %p266 = scmp.gt.s32.totalorder %s262, 8
        %p267 = scmp.lt.s32.totalorder %s256, 64
        %p268 = pnand %p266, %p267
        %p269 = pneg %p268
        %p270 = scmp.gt.s32.totalorder %s262, 72
        %p271 = por %p265, %p269
        %p272 = por %p271, %p270
        // Predicated region
        $region41: #{tpu_custom_call.1} parent=27 // pred_check
          %p273 = pneg %p272
        $region42: #{tpu_custom_call.1} parent=27 // pred_check_branch
          %275 = sbr.rel (%p273) target = $region44
        $region43: #{tpu_custom_call.1} parent=27 // pred_region
          %v276 = vlaneseq
          %v277 = vshrl.u32 %v276, 7
          %v278 = vadd.s32 %v277, 8
          %v279 = vstv %s260
          %v280 = vadd.s32 %v279, %v277
          %v281 = vadd.s32 %v279, %v278
          %v282 = vlaneseq
          %v283 = vand.u32 %v282, 127
          %v284 = vstv %s256
          %v285 = vadd.s32 %v284, %v283
          %vm286 = vcmp.eq.s32.totalorder %v280, %v285
          %vm287 = vcmp.eq.s32.totalorder %v281, %v285
          %vm288 = vcmp.ge.s32.totalorder %v285, 8
          %vm289 = vcmp.lt.s32.totalorder %v285, 64
          %vm290 = vmand %vm288, %vm289
          %vm291 = vmor %vm286, %vm290
          %vm292 = vmor %vm287, %vm290
          %vm293 = vcmp.ge.s32.totalorder %v285, 72
          %vm294 = vmor %vm291, %vm293
          %vm295 = vmor %vm292, %vm293
          %v296 = vsel %vm294, -1e+30, %v251
          %v297 = vsel %vm295, -1e+30, %v254
          %v298 = vld [vmem:[#allocation2] sm:$0xff]
          %v299 = vld [vmem:[#allocation2 + $0x8] sm:$0xff]
          %300 = vmax.xlane.f32.xlu0 %v296
          %v301 = vpop.xlane.xlu0 %300
          %302 = vmax.xlane.f32.xlu0 %v297
          %v303 = vpop.xlane.xlu0 %302
          %v304 = vmax.f32 %v298, %v301
          %v305 = vmax.f32 %v299, %v303
          %v306 = vsub.f32 %v298, %v304
          %v307 = vsub.f32 %v299, %v305
          %v308 = vmul.f32 %v306, 1.442695
          %v309 = vpow.pop %v308
          %v310 = vmul.f32 %v307, 1.442695
          %v311 = vpow.pop %v310
          %v312 = vld [vmem:[#allocation3] sm:$0xff]
          %v313 = vld [vmem:[#allocation3 + $0x8] sm:$0xff]
          %v314 = vmul.f32 %v309, %v312
          %v315 = vmul.f32 %v311, %v313
          %317 = vset.pattern.permute.xlu0 0
          %318 = vperm.xlu0 %317, %v304
          %v319 = vpop.permute.xlu0 %318
          %322 = vset.pattern.permute.xlu0 0
          %323 = vperm.xlu0 %322, %v305
          %v324 = vpop.permute.xlu0 %323
          %v326 = vsub.f32 %v296, %v319
          %v327 = vsub.f32 %v297, %v324
          %v328 = vmul.f32 %v326, 1.442695
          %v329 = vpow.pop %v328
          %v330 = vmul.f32 %v327, 1.442695
          %v331 = vpow.pop %v330
          %332 = vadd.xlane.f32.xlu0 %v329
          %v333 = vpop.xlane.xlu0 %332
          %334 = vadd.xlane.f32.xlu0 %v331
          %v335 = vpop.xlane.xlu0 %334
          %v336 = vadd.f32 %v314, %v333
          %v337 = vadd.f32 %v315, %v335
          %vm338 = vcmask 7168
          %339 = vst.msk [vmem:[#allocation3] sm:$0xff] %vm338, %v336
          %340 = vst.msk [vmem:[#allocation3 + $0x8] sm:$0xff] %vm338, %v337
          %341 = vst.msk [vmem:[#allocation2] sm:$0xff] %vm338, %v304
          %342 = vst.msk [vmem:[#allocation2 + $0x8] sm:$0xff] %vm338, %v305
        $region44: #{tpu_custom_call.1} parent=27 // pred_fallthru
          _
        %p343 = pneg %p272
        // Predicated region
        $region45: #{tpu_custom_call.1} parent=27 // pred_check
          _
        $region46: #{tpu_custom_call.1} parent=27 // pred_check_branch
          %345 = sbr.rel (%p272) target = $region48
        $region47: #{tpu_custom_call.1} parent=27 // pred_region
          %v346 = vld [vmem:[#allocation2] sm:$0xff]
          %v347 = vld [vmem:[#allocation2 + $0x8] sm:$0xff]
          %348 = vmax.xlane.f32.xlu0 %v251
          %v349 = vpop.xlane.xlu0 %348
          %350 = vmax.xlane.f32.xlu0 %v254
          %v351 = vpop.xlane.xlu0 %350
          %v352 = vmax.f32 %v346, %v349
          %v353 = vmax.f32 %v347, %v351
          %v354 = vsub.f32 %v346, %v352
          %v355 = vsub.f32 %v347, %v353
          %v356 = vmul.f32 %v354, 1.442695
          %v357 = vpow.pop %v356
          %v358 = vmul.f32 %v355, 1.442695
          %v359 = vpow.pop %v358
          %v360 = vld [vmem:[#allocation3] sm:$0xff]
          %v361 = vld [vmem:[#allocation3 + $0x8] sm:$0xff]
          %v362 = vmul.f32 %v357, %v360
          %v363 = vmul.f32 %v359, %v361
          %365 = vset.pattern.permute.xlu0 0
          %366 = vperm.xlu0 %365, %v352
          %v367 = vpop.permute.xlu0 %366
          %370 = vset.pattern.permute.xlu0 0
          %371 = vperm.xlu0 %370, %v353
          %v372 = vpop.permute.xlu0 %371
          %v374 = vsub.f32 %v251, %v367
          %v375 = vsub.f32 %v254, %v372
          %v376 = vmul.f32 %v374, 1.442695
          %v377 = vpow.pop %v376
          %v378 = vmul.f32 %v375, 1.442695
          %v379 = vpow.pop %v378
          %380 = vadd.xlane.f32.xlu0 %v377
          %v381 = vpop.xlane.xlu0 %380
          %382 = vadd.xlane.f32.xlu0 %v379
          %v383 = vpop.xlane.xlu0 %382
          %v384 = vadd.f32 %v362, %v381
          %v385 = vadd.f32 %v363, %v383
          %vm386 = vcmask 7168
          %387 = vst.msk [vmem:[#allocation3] sm:$0xff] %vm386, %v384
          %388 = vst.msk [vmem:[#allocation3 + $0x8] sm:$0xff] %vm386, %v385
          %389 = vst.msk [vmem:[#allocation2] sm:$0xff] %vm386, %v352
          %390 = vst.msk [vmem:[#allocation2 + $0x8] sm:$0xff] %vm386, %v353
        $region48: #{tpu_custom_call.1} parent=27 // pred_fallthru
          _
        // Predicated region
        $region49: #{tpu_custom_call.1} parent=27 // pred_check
          %p391 = pneg %p206
        $region50: #{tpu_custom_call.1} parent=27 // pred_check_branch
          %393 = sbr.rel (%p391) target = $region52
        $region51: #{tpu_custom_call.1} parent=27 // pred_region
          %v394 = vld [vmem:[#allocation2] sm:$0xff]
          %v395 = vld [vmem:[#allocation2 + $0x8] sm:$0xff]
          %v396 = vld [vmem:[#allocation3] sm:$0xff]
          %v397 = vld [vmem:[#allocation3 + $0x8] sm:$0xff]
          %v398 = vlog2.pop %v396
          %v399 = vmul.f32 %v398, 0.6931472
          %v400 = vlog2.pop %v397
          %v401 = vmul.f32 %v400, 0.6931472
          %v402 = vadd.f32 %v394, %v399
          %v403 = vadd.f32 %v395, %v401
          %vm404 = vcmask 7168
          %405 = vst.msk [vmem:[%s204] sm:$0xff] %vm404, %v402
          %406 = vst.msk [vmem:[%s204 + $0x8] sm:$0xff] %vm404, %v403
        $region52: #{tpu_custom_call.1} parent=27 // pred_fallthru
          _
        %s407 = smul.u32 2, %s21
        %p408 = scmp.lt.s32.totalorder %s407, 15
        %s409 = scalar_select %p408, %s407, 15
        %s410 = smul.addr %s409, 8
        %s411 = scalar_lea.vmem %s2, %s410
        // Predicated region
        $region53: #{tpu_custom_call.1} parent=27 // pred_check
          %p412 = pneg %p99
        $region54: #{tpu_custom_call.1} parent=27 // pred_check_branch
          %414 = sbr.rel (%p412) target = $region56
        $region55: #{tpu_custom_call.1} parent=27 // pred_region
          %s415 = smul.u32 2, %s21
        $region56: #{tpu_custom_call.1} parent=27 // pred_fallthru
          _
      $region28: #{tpu_custom_call.1} parent=5 // pred_fallthru
        _
      %p416 = scmp.le.s32.totalorder 2, %s12
      // Predicated region
      $region57: #{tpu_custom_call.1} parent=5 // pred_check
        %p417 = pneg %p416
      $region58: #{tpu_custom_call.1} parent=5 // pred_check_branch
        %419 = sbr.rel (%p417) target = $region60
      $region59: #{tpu_custom_call.1} parent=5 // pred_region
        %s420 = ssub.s32 %s12, 2
        // Predicated region
        $region61: #{tpu_custom_call.1} parent=59 // pred_check
          %p421 = pneg %p105
        $region62: #{tpu_custom_call.1} parent=59 // pred_check_branch
          %423 = sbr.rel (%p421) target = $region64
        $region63: #{tpu_custom_call.1} parent=59 // pred_region
          %s424 = smul.u32 2, %s23
          %p425 = scmp.lt.s32.totalorder %s424, 15
          %s426 = scalar_select %p425, %s424, 15
          %s427 = smul.addr %s426, 8
          %s428 = scalar_lea.vmem %s2, %s427
        $region64: #{tpu_custom_call.1} parent=59 // pred_fallthru
          _
      $region60: #{tpu_custom_call.1} parent=5 // pred_fallthru
        _
    $region6: #{tpu_custom_call.1} parent=1 // loop_footer
      %s16 = sadd.s32 1, %s12
    $region7: #{tpu_custom_call.1} parent=1 // loop_footer_branch
      %11 = sbr.rel target = $region3
    $region8: #{tpu_custom_call.1} parent=1 // loop_exit
      _
    %429 = vsyncpa [#allocation5], 1
    %s430 = scalar_lea.sflag [#allocation5], 1
    %431 = vsyncpa %s430, 1
    %432 = vsyncpa [#allocation7], 1

</llo_original>
